<compile_context>
chip_gen: v6e
topology: v6e:2x2x1
jax: 0.10.0
libtpu: 0.0.40
codegen_flags: <defaults>
</compile_context>

<pallas_src>
import functools

import jax
import jax.numpy as jnp
from jax.experimental import pallas as pl

SEQ = 128      # rows of x2
D_IN = 128     # input features
D_QK = 64      # query/key projection dim
D_V = 128      # value projection dim
DROP_P = 0.5   # nn.Dropout(0.5), training-mode semantics
INV_SCALE = 10.0


def attn_kernel(x_ref, w_qkv_ref, keep_ref, o_ref, *, use_approx_recip):
    # Whole problem (<1 MiB) lives in VMEM; single invocation, fully fused.
    x = x_ref[...]                      # (SEQ, D_IN)  bf16
    w = w_qkv_ref[...]                  # (D_IN, 2*D_QK + D_V) bf16

    # One fused QKV projection (f32 accumulation on the MXU).
    qkv = jnp.dot(x, w, preferred_element_type=jnp.float32)    # (SEQ, 256) f32

    # Fold the 1/10 scale into q (touches 128x64 elements instead of 128x128).
    q = qkv[:, :D_QK] * (1.0 / INV_SCALE)
    k = qkv[:, D_QK:2 * D_QK]
    v = qkv[:, 2 * D_QK:]

    # qk = q @ k^T without materializing k.T (contract the feature dim).
    qk = jax.lax.dot_general(
        q.astype(jnp.bfloat16), k.astype(jnp.bfloat16),
        dimension_numbers=(((1,), (1,)), ((), ())),
        preferred_element_type=jnp.float32)                    # (SEQ, SEQ) f32

    # Numerically stable softmax over the last dim (kept in f32).
    m = jnp.max(qk, axis=-1, keepdims=True)
    e = jnp.exp(qk - m)
    denom = jnp.sum(e, axis=-1, keepdims=True)
    if use_approx_recip:
        # EUP vrcp; fold the dropout 1/(1-p) = 2.0 rescale into the same mul.
        inv = pl.reciprocal(denom, approx=True) * (1.0 / (1.0 - DROP_P))
    else:
        inv = (1.0 / (1.0 - DROP_P)) / denom
    # Dropout: keep_ref is a precomputed 0/1 mask; survivors already rescaled.
    p = e * inv * keep_ref[...]

    # output = dropout_qk @ v  (bf16 operands, f32 accumulation).
    o_ref[...] = jnp.dot(p.astype(jnp.bfloat16), v.astype(jnp.bfloat16),
                         preferred_element_type=jnp.float32)


def model_forward(x, w_qkv_t, keep_mask):
    use_approx = jax.default_backend() == "tpu"
    kernel = functools.partial(attn_kernel, use_approx_recip=use_approx)
    return pl.pallas_call(
        kernel,
        out_shape=jax.ShapeDtypeStruct((SEQ, D_V), jnp.float32),
    )(x.astype(jnp.bfloat16), w_qkv_t.astype(jnp.bfloat16), keep_mask)


if __name__ == "__main__":
    key = jax.random.PRNGKey(0)
    kx, kq, kk, kv, kd = jax.random.split(key, 5)

    # input x2 ~ randn(128, 128)
    x = jax.random.normal(kx, (SEQ, D_IN), dtype=jnp.float32)

    # PyTorch-style Linear weights, uniform(-1/sqrt(in), 1/sqrt(in)),
    # stored as (out, in) then transposed + concatenated for the fused matmul.
    bound = 1.0 / (D_IN ** 0.5)
    wq = jax.random.uniform(kq, (D_QK, D_IN), jnp.float32, -bound, bound)
    wk = jax.random.uniform(kk, (D_QK, D_IN), jnp.float32, -bound, bound)
    wv = jax.random.uniform(kv, (D_V, D_IN), jnp.float32, -bound, bound)
    w_qkv_t = jnp.concatenate([wq.T, wk.T, wv.T], axis=1)   # (128, 256)

    # Dropout(0.5) training-mode keep mask (fresh per forward; full entropy).
    keep_mask = jax.random.bernoulli(kd, 1.0 - DROP_P, (SEQ, SEQ)).astype(
        jnp.float32)

    out = model_forward(x, w_qkv_t, keep_mask)
    jax.block_until_ready(out)
    assert out.shape == (SEQ, D_V) and out.dtype == jnp.float32
    assert bool(jnp.all(jnp.isfinite(out)))
    print("KERNEL_OK")
</pallas_src>

<mosaic_0001>
module attributes {stable_mosaic.version = 11 : i64} {
  func.func @attn_kernel(%arg0: memref<128x128xbf16, #tpu.memory_space<vmem>>, %arg1: memref<128x256xbf16, #tpu.memory_space<vmem>>, %arg2: memref<128x128xf32, #tpu.memory_space<vmem>>, %arg3: memref<128x128xf32, #tpu.memory_space<vmem>>) attributes {dimension_semantics = [], scalar_prefetch = 0 : i64, scratch_operands = 0 : i64, tpu.core_type = #tpu.core_type<tc>} {
    %c0 = arith.constant 0 : index
    %c0_0 = arith.constant 0 : index
    %0 = vector.load %arg0[%c0, %c0_0] : memref<128x128xbf16, #tpu.memory_space<vmem>>, vector<128x128xbf16>
    %c0_1 = arith.constant 0 : index
    %c0_2 = arith.constant 0 : index
    %1 = vector.load %arg1[%c0_1, %c0_2] : memref<128x256xbf16, #tpu.memory_space<vmem>>, vector<128x256xbf16>
    %cst = arith.constant dense<0.000000e+00> : vector<128x256xf32>
    %2 = tpu.matmul %0, %1, %cst {dimension_numbers = #tpu.dot_dimension_numbers<[1], [0], [0], [1], [0, 0, 1, 1], [], []>} : vector<128x128xbf16>, vector<128x256xbf16>, vector<128x256xf32> -> vector<128x256xf32>
    %3 = vector.extract_strided_slice %2 {offsets = [0, 0], sizes = [128, 64], strides = [1, 1]} : vector<128x256xf32> to vector<128x64xf32>
    %cst_3 = arith.constant 1.000000e-01 : f32
    %4 = vector.broadcast %cst_3 : f32 to vector<128x64xf32>
    %5 = arith.mulf %3, %4 : vector<128x64xf32>
    %6 = vector.extract_strided_slice %2 {offsets = [0, 64], sizes = [128, 64], strides = [1, 1]} : vector<128x256xf32> to vector<128x64xf32>
    %7 = vector.extract_strided_slice %2 {offsets = [0, 128], sizes = [128, 128], strides = [1, 1]} : vector<128x256xf32> to vector<128x128xf32>
    %8 = arith.truncf %5 : vector<128x64xf32> to vector<128x64xbf16>
    %9 = arith.truncf %6 : vector<128x64xf32> to vector<128x64xbf16>
    %cst_4 = arith.constant dense<0.000000e+00> : vector<128x128xf32>
    %10 = tpu.matmul %8, %9, %cst_4 {dimension_numbers = #tpu.dot_dimension_numbers<[1], [1], [0], [0], [0, 0, 1, 0], [], []>} : vector<128x64xbf16>, vector<128x64xbf16>, vector<128x128xf32> -> vector<128x128xf32>
    %cst_5 = arith.constant dense<0xFF800000> : vector<128xf32>
    %11 = vector.multi_reduction <maximumf>, %10, %cst_5 [1] : vector<128x128xf32> to vector<128xf32>
    %12 = vector.shape_cast %11 : vector<128xf32> to vector<128x1xf32>
    %13 = vector.broadcast %12 : vector<128x1xf32> to vector<128x128xf32>
    %14 = arith.subf %10, %13 : vector<128x128xf32>
    %15 = math.exp %14 : vector<128x128xf32>
    %cst_6 = arith.constant dense<0.000000e+00> : vector<128xf32>
    %16 = vector.multi_reduction <add>, %15, %cst_6 [1] : vector<128x128xf32> to vector<128xf32>
    %17 = vector.shape_cast %16 : vector<128xf32> to vector<128x1xf32>
    %cst_7 = arith.constant 2.000000e+00 : f32
    %18 = vector.broadcast %cst_7 : f32 to vector<128x1xf32>
    %19 = arith.divf %18, %17 : vector<128x1xf32>
    %20 = vector.broadcast %19 : vector<128x1xf32> to vector<128x128xf32>
    %21 = arith.mulf %15, %20 : vector<128x128xf32>
    %c0_8 = arith.constant 0 : index
    %c0_9 = arith.constant 0 : index
    %22 = vector.load %arg2[%c0_8, %c0_9] : memref<128x128xf32, #tpu.memory_space<vmem>>, vector<128x128xf32>
    %23 = arith.mulf %21, %22 : vector<128x128xf32>
    %24 = arith.truncf %23 : vector<128x128xf32> to vector<128x128xbf16>
    %25 = arith.truncf %7 : vector<128x128xf32> to vector<128x128xbf16>
    %cst_10 = arith.constant dense<0.000000e+00> : vector<128x128xf32>
    %26 = tpu.matmul %24, %25, %cst_10 {dimension_numbers = #tpu.dot_dimension_numbers<[1], [0], [0], [1], [0, 0, 1, 1], [], []>} : vector<128x128xbf16>, vector<128x128xbf16>, vector<128x128xf32> -> vector<128x128xf32>
    %c0_11 = arith.constant 0 : index
    %c0_12 = arith.constant 0 : index
    %27 = vector.load %arg3[%c0_11, %c0_12] : memref<128x128xf32, #tpu.memory_space<vmem>>, vector<128x128xf32>
    tpu.vector_store %arg3[%c0_11, %c0_12], %26 {strides = array<i32>} : memref<128x128xf32, #tpu.memory_space<vmem>>, vector<128x128xf32>,
    return
  }
}

</mosaic_0001>

<llo_original>
// kernel: tpu_custom_call.1
$region0: #{tpu_custom_call.1}
  #allocation0 [shape = 'u32[]', space=smem, size = 0x4, offset = 0x4, fixed_abs, tag = 'smem constant byte address 0x4 - core index']
  #allocation1 [shape = 'u32[144,128]{1,0:T(1,128)}', space=vmem, size = 0x12000, scoped, tag = 'internal scratch']
  %s0 = inlined_call_operand.hbm [shape: bf16[128,128], index: 0, kind: input, shape index: {}]
  %s1 = inlined_call_operand.hbm [shape: bf16[128,256], index: 1, kind: input, shape index: {}]
  %s2 = inlined_call_operand.hbm [shape: f32[128,128], index: 2, kind: input, shape index: {}]
  %s3 = inlined_call_operand.hbm [shape: f32[128,128], index: 3, kind: output, shape index: {}]
  %s4 = sld [smem:[#allocation0]]
  $region34: #{tpu_custom_call.1} parent=0
    _
  %s6 = ssub.s32 1, %s4
  %s7 = scalar_select 0, %s6, %s4
  $region1: #{tpu_custom_call.1} parent=0
    #allocation2 [shape = 'u8[32768]{0}', space=vmem, size = 0x8000, scoped, tag = 'input window, operand 0, single buffered']
    #allocation3 [shape = 's32[1]{0}', space=sflag, size = 0x4, scoped, tag = 'scoped memory for tpu_custom_call.1']
    #allocation4 [shape = 's32[1]{0}', space=sflag, size = 0x4, scoped, tag = 'scoped memory for tpu_custom_call.1']
    #allocation5 [shape = 'u8[65536]{0}', space=vmem, size = 0x10000, scoped, tag = 'input window, operand 1, single buffered']
    #allocation6 [shape = 's32[1]{0}', space=sflag, size = 0x4, scoped, tag = 'scoped memory for tpu_custom_call.1']
    #allocation7 [shape = 'u8[65536]{0}', space=vmem, size = 0x10000, scoped, tag = 'input window, operand 2, single buffered']
    #allocation8 [shape = 'u8[65536]{0}', space=vmem, size = 0x10000, scoped, tag = 'output window, operand 0, single buffered']
    %8 = vsyncpa [#allocation3], 0
    %9 = vsyncpa [#allocation6], 0
    %10 = vsyncpa [#allocation4], 0
    // Predicated region
    $region2: #{tpu_custom_call.1} parent=1 // pred_check
      _
    $region3: #{tpu_custom_call.1} parent=1 // pred_check_branch
      %12 = sbr.rel (0) target = $region5
    $region4: #{tpu_custom_call.1} parent=1 // pred_region
      %s14 = ssub.s32 1024, 1024
      %15 = vsyncadd [#allocation3], %s14
      %s16 = sshll.u32 [#allocation2], 4
      %s17 = int_to_ptr.vmem [resolvable:$true] %s16
      %22 = dma.hbm_to_vmem [thread:$0]  %s0, 1024, %s17, [#allocation3], 64, 64, 4
    $region5: #{tpu_custom_call.1} parent=1 // pred_fallthru
      _
    // Predicated region
    $region6: #{tpu_custom_call.1} parent=1 // pred_check
      _
    $region7: #{tpu_custom_call.1} parent=1 // pred_check_branch
      %24 = sbr.rel (0) target = $region9
    $region8: #{tpu_custom_call.1} parent=1 // pred_region
      %s26 = ssub.s32 2048, 2048
      %27 = vsyncadd [#allocation6], %s26
      %s28 = sshll.u32 [#allocation5], 4
      %s29 = int_to_ptr.vmem [resolvable:$true] %s28
      %34 = dma.hbm_to_vmem [thread:$0]  %s1, 2048, %s29, [#allocation6], 128, 128, 8
    $region9: #{tpu_custom_call.1} parent=1 // pred_fallthru
      _
    // Predicated region
    $region10: #{tpu_custom_call.1} parent=1 // pred_check
      _
    $region11: #{tpu_custom_call.1} parent=1 // pred_check_branch
      %36 = sbr.rel (0) target = $region13
    $region12: #{tpu_custom_call.1} parent=1 // pred_region
      %s38 = ssub.s32 2048, 2048
      %39 = vsyncadd [#allocation6], %s38
      %s40 = sshll.u32 [#allocation7], 4
      %s41 = int_to_ptr.vmem [resolvable:$true] %s40
      %46 = dma.hbm_to_vmem [thread:$0]  %s2, 2048, %s41, [#allocation6], 128, 128, 8
    $region13: #{tpu_custom_call.1} parent=1 // pred_fallthru
      _
    // Predicated region
    $region14: #{tpu_custom_call.1} parent=1 // pred_check
      _
    $region15: #{tpu_custom_call.1} parent=1 // pred_check_branch
      %48 = sbr.rel (0) target = $region17
    $region16: #{tpu_custom_call.1} parent=1 // pred_region
      %49 = dma.done [#allocation3], 1024
    $region17: #{tpu_custom_call.1} parent=1 // pred_fallthru
      _
    // Predicated region
    $region18: #{tpu_custom_call.1} parent=1 // pred_check
      _
    $region19: #{tpu_custom_call.1} parent=1 // pred_check_branch
      %51 = sbr.rel (0) target = $region21
    $region20: #{tpu_custom_call.1} parent=1 // pred_region
      %52 = dma.done [#allocation6], 2048
    $region21: #{tpu_custom_call.1} parent=1 // pred_fallthru
      _
    // Predicated region
    $region22: #{tpu_custom_call.1} parent=1 // pred_check
      _
    $region23: #{tpu_custom_call.1} parent=1 // pred_check_branch
      %54 = sbr.rel (0) target = $region25
    $region24: #{tpu_custom_call.1} parent=1 // pred_region
      %55 = dma.done [#allocation6], 2048
    $region25: #{tpu_custom_call.1} parent=1 // pred_fallthru
      _
    %v57 = vld [vmem:[#allocation2] sm:$0xf]
    %v58 = vld [vmem:[#allocation2 + $0x4] sm:$0xf]
    %v59 = vld [vmem:[#allocation2 + $0x8] sm:$0xf]
    %v60 = vld [vmem:[#allocation2 + $0xc] sm:$0xf]
    %v61 = vld [vmem:[#allocation2 + $0x10] sm:$0xf]
    %v62 = vld [vmem:[#allocation2 + $0x14] sm:$0xf]
    %v63 = vld [vmem:[#allocation2 + $0x18] sm:$0xf]
    %v64 = vld [vmem:[#allocation2 + $0x1c] sm:$0xf]
    %v65 = vld [vmem:[#allocation2 + $0x20] sm:$0xf]
    %v66 = vld [vmem:[#allocation2 + $0x24] sm:$0xf]
    %v67 = vld [vmem:[#allocation2 + $0x28] sm:$0xf]
    %v68 = vld [vmem:[#allocation2 + $0x2c] sm:$0xf]
    %v69 = vld [vmem:[#allocation2 + $0x30] sm:$0xf]
    %v70 = vld [vmem:[#allocation2 + $0x34] sm:$0xf]
    %v71 = vld [vmem:[#allocation2 + $0x38] sm:$0xf]
    %v72 = vld [vmem:[#allocation2 + $0x3c] sm:$0xf]
    %v73 = vld [vmem:[#allocation5] sm:$0xff]
    %v74 = vld [vmem:[#allocation5 + $0x8] sm:$0xff]
    %v75 = vld [vmem:[#allocation5 + $0x10] sm:$0xff]
    %v76 = vld [vmem:[#allocation5 + $0x18] sm:$0xff]
    %v77 = vld [vmem:[#allocation5 + $0x20] sm:$0xff]
    %v78 = vld [vmem:[#allocation5 + $0x28] sm:$0xff]
    %v79 = vld [vmem:[#allocation5 + $0x30] sm:$0xff]
    %v80 = vld [vmem:[#allocation5 + $0x38] sm:$0xff]
    %v81 = vld [vmem:[#allocation5 + $0x40] sm:$0xff]
    %v82 = vld [vmem:[#allocation5 + $0x48] sm:$0xff]
    %v83 = vld [vmem:[#allocation5 + $0x50] sm:$0xff]
    %v84 = vld [vmem:[#allocation5 + $0x58] sm:$0xff]
    %v85 = vld [vmem:[#allocation5 + $0x60] sm:$0xff]
    %v86 = vld [vmem:[#allocation5 + $0x68] sm:$0xff]
    %v87 = vld [vmem:[#allocation5 + $0x70] sm:$0xff]
    %v88 = vld [vmem:[#allocation5 + $0x78] sm:$0xff]
    %v105 = vunpack.c.l.b16 %v57
    %v106 = vunpack.c.l.b16 %v58
    %v107 = vunpack.c.l.b16 %v59
    %v108 = vunpack.c.l.b16 %v60
    %v109 = vunpack.c.l.b16 %v61
    %v110 = vunpack.c.l.b16 %v62
    %v111 = vunpack.c.l.b16 %v63
    %v112 = vunpack.c.l.b16 %v64
    %v113 = vunpack.c.l.b16 %v65
    %v114 = vunpack.c.l.b16 %v66
    %v115 = vunpack.c.l.b16 %v67
    %v116 = vunpack.c.l.b16 %v68
    %v117 = vunpack.c.l.b16 %v69
    %v118 = vunpack.c.l.b16 %v70
    %v119 = vunpack.c.l.b16 %v71
    %v120 = vunpack.c.l.b16 %v72
    %v121 = vpack.c.b16 %v106, %v105
    %v122 = vpack.c.b16 %v108, %v107
    %v123 = vpack.c.b16 %v110, %v109
    %v124 = vpack.c.b16 %v112, %v111
    %v125 = vpack.c.b16 %v114, %v113
    %v126 = vpack.c.b16 %v116, %v115
    %v127 = vpack.c.b16 %v118, %v117
    %v128 = vpack.c.b16 %v120, %v119
    %v153 = vunpack.c.l.b16 %v73
    %v154 = vunpack.c.h.b16 %v73
    %v155 = vunpack.c.l.b16 %v74
    %v156 = vunpack.c.h.b16 %v74
    %v157 = vunpack.c.l.b16 %v75
    %v158 = vunpack.c.h.b16 %v75
    %v159 = vunpack.c.l.b16 %v76
    %v160 = vunpack.c.h.b16 %v76
    %v161 = vunpack.c.l.b16 %v77
    %v162 = vunpack.c.h.b16 %v77
    %v163 = vunpack.c.l.b16 %v78
    %v164 = vunpack.c.h.b16 %v78
    %v165 = vunpack.c.l.b16 %v79
    %v166 = vunpack.c.h.b16 %v79
    %v167 = vunpack.c.l.b16 %v80
    %v168 = vunpack.c.h.b16 %v80
    %v169 = vunpack.c.l.b16 %v81
    %v170 = vunpack.c.h.b16 %v81
    %v171 = vunpack.c.l.b16 %v82
    %v172 = vunpack.c.h.b16 %v82
    %v173 = vunpack.c.l.b16 %v83
    %v174 = vunpack.c.h.b16 %v83
    %v175 = vunpack.c.l.b16 %v84
    %v176 = vunpack.c.h.b16 %v84
    %v177 = vunpack.c.l.b16 %v85
    %v178 = vunpack.c.h.b16 %v85
    %v179 = vunpack.c.l.b16 %v86
    %v180 = vunpack.c.h.b16 %v86
    %v181 = vunpack.c.l.b16 %v87
    %v182 = vunpack.c.h.b16 %v87
    %v183 = vunpack.c.l.b16 %v88
    %v184 = vunpack.c.h.b16 %v88
    %v185 = vpack.c.b16 %v155, %v153
    %v186 = vpack.c.b16 %v156, %v154
    %v187 = vpack.c.b16 %v159, %v157
    %v188 = vpack.c.b16 %v160, %v158
    %v189 = vpack.c.b16 %v163, %v161
    %v190 = vpack.c.b16 %v164, %v162
    %v191 = vpack.c.b16 %v167, %v165
    %v192 = vpack.c.b16 %v168, %v166
    %v193 = vpack.c.b16 %v171, %v169
    %v194 = vpack.c.b16 %v172, %v170
    %v195 = vpack.c.b16 %v175, %v173
    %v196 = vpack.c.b16 %v176, %v174
    %v197 = vpack.c.b16 %v179, %v177
    %v198 = vpack.c.b16 %v180, %v178
    %v199 = vpack.c.b16 %v183, %v181
    %v200 = vpack.c.b16 %v184, %v182
    %217 = vmatprep.subr.bf16.mxu0 %v200
    %218 = vmatpush1.bf16.msra.mxu0 %v199
    %219 = vmatprep.subr.bf16.mxu0 %v198
    %220 = vmatpush1.bf16.msra.mxu0 %v197
    %221 = vmatprep.subr.bf16.mxu0 %v196
    %222 = vmatpush1.bf16.msra.mxu0 %v195
    %223 = vmatprep.subr.bf16.mxu0 %v194
    %224 = vmatpush1.bf16.msra.mxu0 %v193
    %225 = vmatprep.subr.bf16.mxu0 %v192
    %226 = vmatpush1.bf16.msra.mxu0 %v191
    %227 = vmatprep.subr.bf16.mxu0 %v190
    %228 = vmatpush1.bf16.msra.mxu0 %v189
    %229 = vmatprep.subr.bf16.mxu0 %v188
    %230 = vmatpush1.bf16.msra.mxu0 %v187
    %231 = vmatprep.subr.bf16.mxu0 %v186
    %232 = vmatpush1.bf16.msra.mxu0 %v185
    %233 = vmatprep.subr.bf16.mxu0 0
    %234 = vmatpush2.bf16.msra.mxu0 0
    %235 = vmatprep.subr.bf16.mxu0 0
    %236 = vmatpush2.bf16.msra.mxu0 0
    %237 = vmatprep.subr.bf16.mxu0 0
    %238 = vmatpush2.bf16.msra.mxu0 0
    %239 = vmatprep.subr.bf16.mxu0 0
    %240 = vmatpush2.bf16.msra.mxu0 0
    %241 = vmatprep.subr.bf16.mxu0 0
    %242 = vmatpush2.bf16.msra.mxu0 0
    %243 = vmatprep.subr.bf16.mxu0 0
    %244 = vmatpush2.bf16.msra.mxu0 0
    %245 = vmatprep.subr.bf16.mxu0 0
    %246 = vmatpush2.bf16.msra.mxu0 0
    %247 = vmatprep.subr.bf16.mxu0 0
    %248 = vmatpush2.bf16.msra.mxu0 0
    %249 = vmatprep.mubr.bf16.mxu0 0
    %250 = vmatmul.mubr.bf16.gmra.mxu0 %v121
    %v251 = vpop.f32.mrf.mxu0
    %v252 = vadd.f32 0.0, %v251
    %v253 = vpop.f32.mrf.mxu0
    %v254 = vadd.f32 0.0, %v253
    %v255 = vpop.f32.mrf.mxu0
    %v256 = vadd.f32 0.0, %v255
    %v257 = vpop.f32.mrf.mxu0
    %v258 = vadd.f32 0.0, %v257
    %259 = vmatprep.mubr.bf16.mxu0 0
    %260 = vmatmul.mubr.bf16.gmra.mxu0 %v122
    %v261 = vpop.f32.mrf.mxu0
    %v262 = vadd.f32 0.0, %v261
    %v263 = vpop.f32.mrf.mxu0
    %v264 = vadd.f32 0.0, %v263
    %v265 = vpop.f32.mrf.mxu0
    %v266 = vadd.f32 0.0, %v265
    %v267 = vpop.f32.mrf.mxu0
    %v268 = vadd.f32 0.0, %v267
    %269 = vmatprep.mubr.bf16.mxu0 0
    %270 = vmatmul.mubr.bf16.gmra.mxu0 %v123
    %v271 = vpop.f32.mrf.mxu0
    %v272 = vadd.f32 0.0, %v271
    %v273 = vpop.f32.mrf.mxu0
    %v274 = vadd.f32 0.0, %v273
    %v275 = vpop.f32.mrf.mxu0
    %v276 = vadd.f32 0.0, %v275
    %v277 = vpop.f32.mrf.mxu0
    %v278 = vadd.f32 0.0, %v277
    %279 = vmatprep.mubr.bf16.mxu0 0
    %280 = vmatmul.mubr.bf16.gmra.mxu0 %v124
    %v281 = vpop.f32.mrf.mxu0
    %v282 = vadd.f32 0.0, %v281
    %v283 = vpop.f32.mrf.mxu0
    %v284 = vadd.f32 0.0, %v283
    %v285 = vpop.f32.mrf.mxu0
    %v286 = vadd.f32 0.0, %v285
    %v287 = vpop.f32.mrf.mxu0
    %v288 = vadd.f32 0.0, %v287
    %289 = vmatprep.mubr.bf16.mxu0 0
    %290 = vmatmul.mubr.bf16.gmra.mxu0 %v125
    %v291 = vpop.f32.mrf.mxu0
    %v292 = vadd.f32 0.0, %v291
    %v293 = vpop.f32.mrf.mxu0
    %v294 = vadd.f32 0.0, %v293
    %v295 = vpop.f32.mrf.mxu0
    %v296 = vadd.f32 0.0, %v295
    %v297 = vpop.f32.mrf.mxu0
    %v298 = vadd.f32 0.0, %v297
    %299 = vmatprep.mubr.bf16.mxu0 0
    %300 = vmatmul.mubr.bf16.gmra.mxu0 %v126
    %v301 = vpop.f32.mrf.mxu0
    %v302 = vadd.f32 0.0, %v301
    %v303 = vpop.f32.mrf.mxu0
    %v304 = vadd.f32 0.0, %v303
    %v305 = vpop.f32.mrf.mxu0
    %v306 = vadd.f32 0.0, %v305
    %v307 = vpop.f32.mrf.mxu0
    %v308 = vadd.f32 0.0, %v307
    %309 = vmatprep.mubr.bf16.mxu0 0
    %310 = vmatmul.mubr.bf16.gmra.mxu0 %v127
    %v311 = vpop.f32.mrf.mxu0
    %v312 = vadd.f32 0.0, %v311
    %v313 = vpop.f32.mrf.mxu0
    %v314 = vadd.f32 0.0, %v313
    %v315 = vpop.f32.mrf.mxu0
    %v316 = vadd.f32 0.0, %v315
    %v317 = vpop.f32.mrf.mxu0
    %v318 = vadd.f32 0.0, %v317
    %319 = vmatprep.mubr.bf16.mxu0 0
    %320 = vmatmul.mubr.bf16.gmra.mxu0 %v128
    %v321 = vpop.f32.mrf.mxu0
    %v322 = vadd.f32 0.0, %v321
    %v323 = vpop.f32.mrf.mxu0
    %v324 = vadd.f32 0.0, %v323
    %v325 = vpop.f32.mrf.mxu0
    %v326 = vadd.f32 0.0, %v325
    %v327 = vpop.f32.mrf.mxu0
    %v328 = vadd.f32 0.0, %v327
    %329 = vdwg.mxu0
    %v330 = vmul.f32 %v252, 0.1
    %v331 = vmul.f32 %v256, 0.1
    %v332 = vmul.f32 %v262, 0.1
    %v333 = vmul.f32 %v266, 0.1
    %v334 = vmul.f32 %v272, 0.1
    %v335 = vmul.f32 %v276, 0.1
    %v336 = vmul.f32 %v282, 0.1
    %v337 = vmul.f32 %v286, 0.1
    %v338 = vmul.f32 %v292, 0.1
    %v339 = vmul.f32 %v296, 0.1
    %v340 = vmul.f32 %v302, 0.1
    %v341 = vmul.f32 %v306, 0.1
    %v342 = vmul.f32 %v312, 0.1
    %v343 = vmul.f32 %v316, 0.1
    %v344 = vmul.f32 %v322, 0.1
    %v345 = vmul.f32 %v326, 0.1
    %v346 = vpack.c.bf16 %v331, %v330
    %v347 = vpack.c.bf16 %v333, %v332
    %v348 = vpack.c.bf16 %v335, %v334
    %v349 = vpack.c.bf16 %v337, %v336
    %v350 = vpack.c.bf16 %v339, %v338
    %v351 = vpack.c.bf16 %v341, %v340
    %v352 = vpack.c.bf16 %v343, %v342
    %v353 = vpack.c.bf16 %v345, %v344
    %v354 = vpack.c.bf16 %v256, %v252
    %v355 = vpack.c.bf16 %v266, %v262
    %v356 = vpack.c.bf16 %v276, %v272
    %v357 = vpack.c.bf16 %v286, %v282
    %v358 = vpack.c.bf16 %v296, %v292
    %v359 = vpack.c.bf16 %v306, %v302
    %v360 = vpack.c.bf16 %v316, %v312
    %v361 = vpack.c.bf16 %v326, %v322
    %370 = vrot.lane.b32.xlu0 %v354, 64
    %v371 = vpop.permute.xlu0 %370
    %372 = vrot.lane.b32.xlu0 %v355, 64
    %v373 = vpop.permute.xlu0 %372
    %374 = vrot.lane.b32.xlu0 %v356, 64
    %v375 = vpop.permute.xlu0 %374
    %376 = vrot.lane.b32.xlu0 %v357, 64
    %v377 = vpop.permute.xlu0 %376
    %378 = vrot.lane.b32.xlu0 %v358, 64
    %v379 = vpop.permute.xlu0 %378
    %380 = vrot.lane.b32.xlu0 %v359, 64
    %v381 = vpop.permute.xlu0 %380
    %382 = vrot.lane.b32.xlu0 %v360, 64
    %v383 = vpop.permute.xlu0 %382
    %384 = vrot.lane.b32.xlu0 %v361, 64
    %v385 = vpop.permute.xlu0 %384
    %vm386 = vcmask 523264
    %v388 = vsel %vm386, %v346, 0
    %v391 = vsel %vm386, %v347, 0
    %v394 = vsel %vm386, %v348, 0
    %v397 = vsel %vm386, %v349, 0
    %v400 = vsel %vm386, %v350, 0
    %v403 = vsel %vm386, %v351, 0
    %v406 = vsel %vm386, %v352, 0
    %v409 = vsel %vm386, %v353, 0
    %v412 = vsel %vm386, %v371, 0
    %v415 = vsel %vm386, %v373, 0
    %v418 = vsel %vm386, %v375, 0
    %v421 = vsel %vm386, %v377, 0
    %v424 = vsel %vm386, %v379, 0
    %v427 = vsel %vm386, %v381, 0
    %v430 = vsel %vm386, %v383, 0
    %v433 = vsel %vm386, %v385, 0
    %435 = vmatprep.subr.bf16.mxu0 0
    %436 = vmatpush1.bf16.xpose.msra.mxu0 %v433
    %437 = vmatprep.subr.bf16.mxu0 0
    %438 = vmatpush1.bf16.xpose.msra.mxu0 %v430
    %439 = vmatprep.subr.bf16.mxu0 0
    %440 = vmatpush1.bf16.xpose.msra.mxu0 %v427
    %441 = vmatprep.subr.bf16.mxu0 0
    %442 = vmatpush1.bf16.xpose.msra.mxu0 %v424
    %443 = vmatprep.subr.bf16.mxu0 0
    %444 = vmatpush1.bf16.xpose.msra.mxu0 %v421
    %445 = vmatprep.subr.bf16.mxu0 0
    %446 = vmatpush1.bf16.xpose.msra.mxu0 %v418
    %447 = vmatprep.subr.bf16.mxu0 0
    %448 = vmatpush1.bf16.xpose.msra.mxu0 %v415
    %449 = vmatprep.subr.bf16.mxu0 0
    %450 = vmatpush1.bf16.xpose.msra.mxu0 %v412
    %451 = vmatprep.subr.bf16.mxu0 0
    %452 = vmatpush2.bf16.xpose.msra.mxu0 0
    %453 = vmatprep.subr.bf16.mxu0 0
    %454 = vmatpush2.bf16.xpose.msra.mxu0 0
    %455 = vmatprep.subr.bf16.mxu0 0
    %456 = vmatpush2.bf16.xpose.msra.mxu0 0
    %457 = vmatprep.subr.bf16.mxu0 0
    %458 = vmatpush2.bf16.xpose.msra.mxu0 0
    %459 = vmatprep.subr.bf16.mxu0 0
    %460 = vmatpush2.bf16.xpose.msra.mxu0 0
    %461 = vmatprep.subr.bf16.mxu0 0
    %462 = vmatpush2.bf16.xpose.msra.mxu0 0
    %463 = vmatprep.subr.bf16.mxu0 0
    %464 = vmatpush2.bf16.xpose.msra.mxu0 0
    %465 = vmatprep.subr.bf16.mxu0 0
    %466 = vmatpush2.bf16.xpose.msra.mxu0 0
    %467 = vmatprep.mubr.bf16.mxu0 0
    %468 = vmatmul.mubr.bf16.gmra.mxu0 %v388
    %v469 = vpop.f32.mrf.mxu0
    %v470 = vadd.f32 0.0, %v469
    %v471 = vpop.f32.mrf.mxu0
    %v472 = vpop.f32.mrf.mxu0
    %v473 = vadd.f32 0.0, %v472
    %v474 = vpop.f32.mrf.mxu0
    %475 = vmatprep.mubr.bf16.mxu0 0
    %476 = vmatmul.mubr.bf16.gmra.mxu0 %v391
    %v477 = vpop.f32.mrf.mxu0
    %v478 = vadd.f32 0.0, %v477
    %v479 = vpop.f32.mrf.mxu0
    %v480 = vpop.f32.mrf.mxu0
    %v481 = vadd.f32 0.0, %v480
    %v482 = vpop.f32.mrf.mxu0
    %483 = vmatprep.mubr.bf16.mxu0 0
    %484 = vmatmul.mubr.bf16.gmra.mxu0 %v394
    %v485 = vpop.f32.mrf.mxu0
    %v486 = vadd.f32 0.0, %v485
    %v487 = vpop.f32.mrf.mxu0
    %v488 = vpop.f32.mrf.mxu0
    %v489 = vadd.f32 0.0, %v488
    %v490 = vpop.f32.mrf.mxu0
    %491 = vmatprep.mubr.bf16.mxu0 0
    %492 = vmatmul.mubr.bf16.gmra.mxu0 %v397
    %v493 = vpop.f32.mrf.mxu0
    %v494 = vadd.f32 0.0, %v493
    %v495 = vpop.f32.mrf.mxu0
    %v496 = vpop.f32.mrf.mxu0
    %v497 = vadd.f32 0.0, %v496
    %v498 = vpop.f32.mrf.mxu0
    %499 = vmatprep.mubr.bf16.mxu0 0
    %500 = vmatmul.mubr.bf16.gmra.mxu0 %v400
    %v501 = vpop.f32.mrf.mxu0
    %v502 = vadd.f32 0.0, %v501
    %v503 = vpop.f32.mrf.mxu0
    %v504 = vpop.f32.mrf.mxu0
    %v505 = vadd.f32 0.0, %v504
    %v506 = vpop.f32.mrf.mxu0
    %507 = vmatprep.mubr.bf16.mxu0 0
    %508 = vmatmul.mubr.bf16.gmra.mxu0 %v403
    %v509 = vpop.f32.mrf.mxu0
    %v510 = vadd.f32 0.0, %v509
    %v511 = vpop.f32.mrf.mxu0
    %v512 = vpop.f32.mrf.mxu0
    %v513 = vadd.f32 0.0, %v512
    %v514 = vpop.f32.mrf.mxu0
    %515 = vmatprep.mubr.bf16.mxu0 0
    %516 = vmatmul.mubr.bf16.gmra.mxu0 %v406
    %v517 = vpop.f32.mrf.mxu0
    %v518 = vadd.f32 0.0, %v517
    %v519 = vpop.f32.mrf.mxu0
    %v520 = vpop.f32.mrf.mxu0
    %v521 = vadd.f32 0.0, %v520
    %v522 = vpop.f32.mrf.mxu0
    %523 = vmatprep.mubr.bf16.mxu0 0
    %524 = vmatmul.mubr.bf16.gmra.mxu0 %v409
    %v525 = vpop.f32.mrf.mxu0
    %v526 = vadd.f32 0.0, %v525
    %v527 = vpop.f32.mrf.mxu0
    %v528 = vpop.f32.mrf.mxu0
    %v529 = vadd.f32 0.0, %v528
    %v530 = vpop.f32.mrf.mxu0
    %531 = vdwg.mxu0
    %532 = vmax.xlane.f32.xlu0 %v470
    %v533 = vpop.xlane.xlu0 %532
    %534 = vmax.xlane.f32.xlu0 %v473
    %v535 = vpop.xlane.xlu0 %534
    %536 = vmax.xlane.f32.xlu0 %v478
    %v537 = vpop.xlane.xlu0 %536
    %538 = vmax.xlane.f32.xlu0 %v481
    %v539 = vpop.xlane.xlu0 %538
    %540 = vmax.xlane.f32.xlu0 %v486
    %v541 = vpop.xlane.xlu0 %540
    %542 = vmax.xlane.f32.xlu0 %v489
    %v543 = vpop.xlane.xlu0 %542
    %544 = vmax.xlane.f32.xlu0 %v494
    %v545 = vpop.xlane.xlu0 %544
    %546 = vmax.xlane.f32.xlu0 %v497
    %v547 = vpop.xlane.xlu0 %546
    %548 = vmax.xlane.f32.xlu0 %v502
    %v549 = vpop.xlane.xlu0 %548
    %550 = vmax.xlane.f32.xlu0 %v505
    %v551 = vpop.xlane.xlu0 %550
    %552 = vmax.xlane.f32.xlu0 %v510
    %v553 = vpop.xlane.xlu0 %552
    %554 = vmax.xlane.f32.xlu0 %v513
    %v555 = vpop.xlane.xlu0 %554
    %556 = vmax.xlane.f32.xlu0 %v518
    %v557 = vpop.xlane.xlu0 %556
    %558 = vmax.xlane.f32.xlu0 %v521
    %v559 = vpop.xlane.xlu0 %558
    %560 = vmax.xlane.f32.xlu0 %v526
    %v561 = vpop.xlane.xlu0 %560
    %562 = vmax.xlane.f32.xlu0 %v529
    %v563 = vpop.xlane.xlu0 %562
    %v564 = vsub.f32 %v470, %v533
    %v565 = vsub.f32 %v473, %v535
    %v566 = vsub.f32 %v478, %v537
    %v567 = vsub.f32 %v481, %v539
    %v568 = vsub.f32 %v486, %v541
    %v569 = vsub.f32 %v489, %v543
    %v570 = vsub.f32 %v494, %v545
    %v571 = vsub.f32 %v497, %v547
    %v572 = vsub.f32 %v502, %v549
    %v573 = vsub.f32 %v505, %v551
    %v574 = vsub.f32 %v510, %v553
    %v575 = vsub.f32 %v513, %v555
    %v576 = vsub.f32 %v518, %v557
    %v577 = vsub.f32 %v521, %v559
    %v578 = vsub.f32 %v526, %v561
    %v579 = vsub.f32 %v529, %v563
    %v580 = vmul.f32 %v564, 1.442695
    %v581 = vpow.pop %v580
    %v582 = vmul.f32 %v565, 1.442695
    %v583 = vpow.pop %v582
    %v584 = vmul.f32 %v566, 1.442695
    %v585 = vpow.pop %v584
    %v586 = vmul.f32 %v567, 1.442695
    %v587 = vpow.pop %v586
    %v588 = vmul.f32 %v568, 1.442695
    %v589 = vpow.pop %v588
    %v590 = vmul.f32 %v569, 1.442695
    %v591 = vpow.pop %v590
    %v592 = vmul.f32 %v570, 1.442695
    %v593 = vpow.pop %v592
    %v594 = vmul.f32 %v571, 1.442695
    %v595 = vpow.pop %v594
    %v596 = vmul.f32 %v572, 1.442695
    %v597 = vpow.pop %v596
    %v598 = vmul.f32 %v573, 1.442695
    %v599 = vpow.pop %v598
    %v600 = vmul.f32 %v574, 1.442695
    %v601 = vpow.pop %v600
    %v602 = vmul.f32 %v575, 1.442695
    %v603 = vpow.pop %v602
    %v604 = vmul.f32 %v576, 1.442695
    %v605 = vpow.pop %v604
    %v606 = vmul.f32 %v577, 1.442695
    %v607 = vpow.pop %v606
    %v608 = vmul.f32 %v578, 1.442695
    %v609 = vpow.pop %v608
    %v610 = vmul.f32 %v579, 1.442695
    %v611 = vpow.pop %v610
    %612 = vadd.xlane.f32.xlu0 %v581
    %v613 = vpop.xlane.xlu0 %612
    %614 = vadd.xlane.f32.xlu0 %v583
    %v615 = vpop.xlane.xlu0 %614
    %616 = vadd.xlane.f32.xlu0 %v585
    %v617 = vpop.xlane.xlu0 %616
    %618 = vadd.xlane.f32.xlu0 %v587
    %v619 = vpop.xlane.xlu0 %618
    %620 = vadd.xlane.f32.xlu0 %v589
    %v621 = vpop.xlane.xlu0 %620
    %622 = vadd.xlane.f32.xlu0 %v591
    %v623 = vpop.xlane.xlu0 %622
    %624 = vadd.xlane.f32.xlu0 %v593
    %v625 = vpop.xlane.xlu0 %624
    %626 = vadd.xlane.f32.xlu0 %v595
    %v627 = vpop.xlane.xlu0 %626
    %628 = vadd.xlane.f32.xlu0 %v597
    %v629 = vpop.xlane.xlu0 %628
    %630 = vadd.xlane.f32.xlu0 %v599
    %v631 = vpop.xlane.xlu0 %630
    %632 = vadd.xlane.f32.xlu0 %v601
    %v633 = vpop.xlane.xlu0 %632
    %634 = vadd.xlane.f32.xlu0 %v603
    %v635 = vpop.xlane.xlu0 %634
    %636 = vadd.xlane.f32.xlu0 %v605
    %v637 = vpop.xlane.xlu0 %636
    %638 = vadd.xlane.f32.xlu0 %v607
    %v639 = vpop.xlane.xlu0 %638
    %640 = vadd.xlane.f32.xlu0 %v609
    %v641 = vpop.xlane.xlu0 %640
    %642 = vadd.xlane.f32.xlu0 %v611
    %v643 = vpop.xlane.xlu0 %642
    %v644 = vrcp.pop %v613
    %v645 = vmul.f32 2.0, %v644
    %v646 = vrcp.pop %v615
    %v647 = vmul.f32 2.0, %v646
    %v648 = vrcp.pop %v617
    %v649 = vmul.f32 2.0, %v648
    %v650 = vrcp.pop %v619
    %v651 = vmul.f32 2.0, %v650
    %v652 = vrcp.pop %v621
    %v653 = vmul.f32 2.0, %v652
    %v654 = vrcp.pop %v623
    %v655 = vmul.f32 2.0, %v654
    %v656 = vrcp.pop %v625
    %v657 = vmul.f32 2.0, %v656
    %v658 = vrcp.pop %v627
    %v659 = vmul.f32 2.0, %v658
    %v660 = vrcp.pop %v629
    %v661 = vmul.f32 2.0, %v660
    %v662 = vrcp.pop %v631
    %v663 = vmul.f32 2.0, %v662
    %v664 = vrcp.pop %v633
    %v665 = vmul.f32 2.0, %v664
    %v666 = vrcp.pop %v635
    %v667 = vmul.f32 2.0, %v666
    %v668 = vrcp.pop %v637
    %v669 = vmul.f32 2.0, %v668
    %v670 = vrcp.pop %v639
    %v671 = vmul.f32 2.0, %v670
    %v672 = vrcp.pop %v641
    %v673 = vmul.f32 2.0, %v672
    %v674 = vrcp.pop %v643
    %v675 = vmul.f32 2.0, %v674
    %v676 = vmul.f32 %v581, %v645
    %v677 = vmul.f32 %v583, %v647
    %v678 = vmul.f32 %v585, %v649
    %v679 = vmul.f32 %v587, %v651
    %v680 = vmul.f32 %v589, %v653
    %v681 = vmul.f32 %v591, %v655
    %v682 = vmul.f32 %v593, %v657
    %v683 = vmul.f32 %v595, %v659
    %v684 = vmul.f32 %v597, %v661
    %v685 = vmul.f32 %v599, %v663
    %v686 = vmul.f32 %v601, %v665
    %v687 = vmul.f32 %v603, %v667
    %v688 = vmul.f32 %v605, %v669
    %v689 = vmul.f32 %v607, %v671
    %v690 = vmul.f32 %v609, %v673
    %v691 = vmul.f32 %v611, %v675
    %v692 = vld [vmem:[#allocation7] sm:$0xff]
    %v693 = vld [vmem:[#allocation7 + $0x8] sm:$0xff]
    %v694 = vld [vmem:[#allocation7 + $0x10] sm:$0xff]
    %v695 = vld [vmem:[#allocation7 + $0x18] sm:$0xff]
    %v696 = vld [vmem:[#allocation7 + $0x20] sm:$0xff]
    %v697 = vld [vmem:[#allocation7 + $0x28] sm:$0xff]
    %v698 = vld [vmem:[#allocation7 + $0x30] sm:$0xff]
    %v699 = vld [vmem:[#allocation7 + $0x38] sm:$0xff]
    %v700 = vld [vmem:[#allocation7 + $0x40] sm:$0xff]
    %v701 = vld [vmem:[#allocation7 + $0x48] sm:$0xff]
    %v702 = vld [vmem:[#allocation7 + $0x50] sm:$0xff]
    %v703 = vld [vmem:[#allocation7 + $0x58] sm:$0xff]
    %v704 = vld [vmem:[#allocation7 + $0x60] sm:$0xff]
    %v705 = vld [vmem:[#allocation7 + $0x68] sm:$0xff]
    %v706 = vld [vmem:[#allocation7 + $0x70] sm:$0xff]
    %v707 = vld [vmem:[#allocation7 + $0x78] sm:$0xff]
    %v708 = vmul.f32 %v676, %v692
    %v709 = vmul.f32 %v677, %v693
    %v710 = vmul.f32 %v678, %v694
    %v711 = vmul.f32 %v679, %v695
    %v712 = vmul.f32 %v680, %v696
    %v713 = vmul.f32 %v681, %v697
    %v714 = vmul.f32 %v682, %v698
    %v715 = vmul.f32 %v683, %v699
    %v716 = vmul.f32 %v684, %v700
    %v717 = vmul.f32 %v685, %v701
    %v718 = vmul.f32 %v686, %v702
    %v719 = vmul.f32 %v687, %v703
    %v720 = vmul.f32 %v688, %v704
    %v721 = vmul.f32 %v689, %v705
    %v722 = vmul.f32 %v690, %v706
    %v723 = vmul.f32 %v691, %v707
    %v724 = vpack.c.bf16 %v709, %v708
    %v725 = vpack.c.bf16 %v711, %v710
    %v726 = vpack.c.bf16 %v713, %v712
    %v727 = vpack.c.bf16 %v715, %v714
    %v728 = vpack.c.bf16 %v717, %v716
    %v729 = vpack.c.bf16 %v719, %v718
    %v730 = vpack.c.bf16 %v721, %v720
    %v731 = vpack.c.bf16 %v723, %v722
    %v732 = vpack.c.bf16 %v258, %v254
    %v733 = vpack.c.bf16 %v268, %v264
    %v734 = vpack.c.bf16 %v278, %v274
    %v735 = vpack.c.bf16 %v288, %v284
    %v736 = vpack.c.bf16 %v298, %v294
    %v737 = vpack.c.bf16 %v308, %v304
    %v738 = vpack.c.bf16 %v318, %v314
    %v739 = vpack.c.bf16 %v328, %v324
    %740 = vmatprep.subr.bf16.mxu0 0
    %741 = vmatpush1.bf16.msra.mxu0 %v739
    %742 = vmatprep.subr.bf16.mxu0 0
    %743 = vmatpush1.bf16.msra.mxu0 %v738
    %744 = vmatprep.subr.bf16.mxu0 0
    %745 = vmatpush1.bf16.msra.mxu0 %v737
    %746 = vmatprep.subr.bf16.mxu0 0
    %747 = vmatpush1.bf16.msra.mxu0 %v736
    %748 = vmatprep.subr.bf16.mxu0 0
    %749 = vmatpush1.bf16.msra.mxu0 %v735
    %750 = vmatprep.subr.bf16.mxu0 0
    %751 = vmatpush1.bf16.msra.mxu0 %v734
    %752 = vmatprep.subr.bf16.mxu0 0
    %753 = vmatpush1.bf16.msra.mxu0 %v733
    %754 = vmatprep.subr.bf16.mxu0 0
    %755 = vmatpush1.bf16.msra.mxu0 %v732
    %756 = vmatprep.subr.bf16.mxu0 0
    %757 = vmatpush2.bf16.msra.mxu0 0
    %758 = vmatprep.subr.bf16.mxu0 0
    %759 = vmatpush2.bf16.msra.mxu0 0
    %760 = vmatprep.subr.bf16.mxu0 0
    %761 = vmatpush2.bf16.msra.mxu0 0
    %762 = vmatprep.subr.bf16.mxu0 0
    %763 = vmatpush2.bf16.msra.mxu0 0
    %764 = vmatprep.subr.bf16.mxu0 0
    %765 = vmatpush2.bf16.msra.mxu0 0
    %766 = vmatprep.subr.bf16.mxu0 0
    %767 = vmatpush2.bf16.msra.mxu0 0
    %768 = vmatprep.subr.bf16.mxu0 0
    %769 = vmatpush2.bf16.msra.mxu0 0
    %770 = vmatprep.subr.bf16.mxu0 0
    %771 = vmatpush2.bf16.msra.mxu0 0
    %772 = vmatprep.mubr.bf16.mxu0 0
    %773 = vmatmul.mubr.bf16.gmra.mxu0 %v724
    %v774 = vpop.f32.mrf.mxu0
    %v775 = vadd.f32 0.0, %v774
    %v776 = vpop.f32.mrf.mxu0
    %v777 = vpop.f32.mrf.mxu0
    %v778 = vadd.f32 0.0, %v777
    %v779 = vpop.f32.mrf.mxu0
    %780 = vmatprep.mubr.bf16.mxu0 0
    %781 = vmatmul.mubr.bf16.gmra.mxu0 %v725
    %v782 = vpop.f32.mrf.mxu0
    %v783 = vadd.f32 0.0, %v782
    %v784 = vpop.f32.mrf.mxu0
    %v785 = vpop.f32.mrf.mxu0
    %v786 = vadd.f32 0.0, %v785
    %v787 = vpop.f32.mrf.mxu0
    %788 = vmatprep.mubr.bf16.mxu0 0
    %789 = vmatmul.mubr.bf16.gmra.mxu0 %v726
    %v790 = vpop.f32.mrf.mxu0
    %v791 = vadd.f32 0.0, %v790
    %v792 = vpop.f32.mrf.mxu0
    %v793 = vpop.f32.mrf.mxu0
    %v794 = vadd.f32 0.0, %v793
    %v795 = vpop.f32.mrf.mxu0
    %796 = vmatprep.mubr.bf16.mxu0 0
    %797 = vmatmul.mubr.bf16.gmra.mxu0 %v727
    %v798 = vpop.f32.mrf.mxu0
    %v799 = vadd.f32 0.0, %v798
    %v800 = vpop.f32.mrf.mxu0
    %v801 = vpop.f32.mrf.mxu0
    %v802 = vadd.f32 0.0, %v801
    %v803 = vpop.f32.mrf.mxu0
    %804 = vmatprep.mubr.bf16.mxu0 0
    %805 = vmatmul.mubr.bf16.gmra.mxu0 %v728
    %v806 = vpop.f32.mrf.mxu0
    %v807 = vadd.f32 0.0, %v806
    %v808 = vpop.f32.mrf.mxu0
    %v809 = vpop.f32.mrf.mxu0
    %v810 = vadd.f32 0.0, %v809
    %v811 = vpop.f32.mrf.mxu0
    %812 = vmatprep.mubr.bf16.mxu0 0
    %813 = vmatmul.mubr.bf16.gmra.mxu0 %v729
    %v814 = vpop.f32.mrf.mxu0
    %v815 = vadd.f32 0.0, %v814
    %v816 = vpop.f32.mrf.mxu0
    %v817 = vpop.f32.mrf.mxu0
    %v818 = vadd.f32 0.0, %v817
    %v819 = vpop.f32.mrf.mxu0
    %820 = vmatprep.mubr.bf16.mxu0 0
    %821 = vmatmul.mubr.bf16.gmra.mxu0 %v730
    %v822 = vpop.f32.mrf.mxu0
    %v823 = vadd.f32 0.0, %v822
    %v824 = vpop.f32.mrf.mxu0
    %v825 = vpop.f32.mrf.mxu0
    %v826 = vadd.f32 0.0, %v825
    %v827 = vpop.f32.mrf.mxu0
    %828 = vmatprep.mubr.bf16.mxu0 0
    %829 = vmatmul.mubr.bf16.gmra.mxu0 %v731
    %v830 = vpop.f32.mrf.mxu0
    %v831 = vadd.f32 0.0, %v830
    %v832 = vpop.f32.mrf.mxu0
    %v833 = vpop.f32.mrf.mxu0
    %v834 = vadd.f32 0.0, %v833
    %v835 = vpop.f32.mrf.mxu0
    %836 = vdwg.mxu0
    %837 = vst [vmem:[#allocation8] sm:$0xff] %v775
    %838 = vst [vmem:[#allocation8 + $0x8] sm:$0xff] %v778
    %839 = vst [vmem:[#allocation8 + $0x10] sm:$0xff] %v783
    %840 = vst [vmem:[#allocation8 + $0x18] sm:$0xff] %v786
    %841 = vst [vmem:[#allocation8 + $0x20] sm:$0xff] %v791
    %842 = vst [vmem:[#allocation8 + $0x28] sm:$0xff] %v794
    %843 = vst [vmem:[#allocation8 + $0x30] sm:$0xff] %v799
    %844 = vst [vmem:[#allocation8 + $0x38] sm:$0xff] %v802
    %845 = vst [vmem:[#allocation8 + $0x40] sm:$0xff] %v807
    %846 = vst [vmem:[#allocation8 + $0x48] sm:$0xff] %v810
    %847 = vst [vmem:[#allocation8 + $0x50] sm:$0xff] %v815
    %848 = vst [vmem:[#allocation8 + $0x58] sm:$0xff] %v818
    %849 = vst [vmem:[#allocation8 + $0x60] sm:$0xff] %v823
    %850 = vst [vmem:[#allocation8 + $0x68] sm:$0xff] %v826
    %851 = vst [vmem:[#allocation8 + $0x70] sm:$0xff] %v831
    %852 = vst [vmem:[#allocation8 + $0x78] sm:$0xff] %v834
    // Predicated region
    $region26: #{tpu_custom_call.1} parent=1 // pred_check
      _
    $region27: #{tpu_custom_call.1} parent=1 // pred_check_branch
      %854 = sbr.rel (0) target = $region29
    $region28: #{tpu_custom_call.1} parent=1 // pred_region
      %s856 = ssub.s32 2048, 2048
      %857 = vsyncadd [#allocation4], %s856
      %s858 = sshll.u32 [#allocation8], 4
      %s859 = int_to_ptr.vmem [resolvable:$true] %s858
      %864 = dma.vmem_to_hbm [thread:$0]  %s859, 2048, %s3, [#allocation4], 128, 128, 8
    $region29: #{tpu_custom_call.1} parent=1 // pred_fallthru
      _
    // Predicated region
    $region30: #{tpu_custom_call.1} parent=1 // pred_check
      _
    $region31: #{tpu_custom_call.1} parent=1 // pred_check_branch
      %866 = sbr.rel (0) target = $region33
    $region32: #{tpu_custom_call.1} parent=1 // pred_region
      %867 = dma.done [#allocation4], 2048
    $region33: #{tpu_custom_call.1} parent=1 // pred_fallthru
      _
    %868 = vsyncpa [#allocation3], 1
    %869 = vsyncpa [#allocation6], 1
    %870 = vsyncpa [#allocation4], 1

</llo_original>
